<compile_context>
chip_gen: v7x
topology: tpu7x:2x2x1
jax: 0.10.0
libtpu: 0.0.40
codegen_flags: <defaults>
</compile_context>

<pallas_src>
from functools import partial

import jax
import jax.numpy as jnp
import numpy as np
from jax import lax
from jax.experimental import pallas as pl
from jax.experimental.pallas import tpu as pltpu

# Module hyper-parameters (from the PyTorch source)
HIDDEN = 32
PITCH_INPUT = 63       # pitch_input_size (vocab + pitch head width)
DUR_INPUT = 20         # dur_input_size   (vocab + dur head width)
PITCH_EMB = 16         # pitch_embedding_size
DUR_EMB = 16           # dur_embedding_size
INPUT_SIZE = PITCH_EMB + DUR_EMB

LANES = 4 * HIDDEN     # 128: gate vector width == one full vreg lane row
DUR_OFF = 64           # lane offset of the dur head inside the packed 128-lane head output
PITCH_ROWS = 64        # 63 gather rows padded to a multiple of 8 sublanes
DUR_ROWS = 24          # 20 gather rows padded to a multiple of 8 sublanes
WSLAB_ROWS = 2 * HIDDEN  # [W_hh^T ; packed head W] = 64 rows


# --------------------------------------------------------------------------------------
# Kernel: the ENTIRE T-step decode runs in one invocation (grid=(1,)).
#   idx_ref : (3, T) int32 in SMEM (scalar prefetch)   rows = [pitch_idx, dur_idx, true_pitch]
#   pg_ref  : (64, 128)  pitch-emb rows folded through W_ih[:, :16]^T, + (b_ih + b_hh)
#   dg_ref  : (24, 128)  dur-emb rows folded through W_ih[:, 16:]^T
#   tp_ref  : (64, 128)  true-pitch rows: lanes 0:63 = pitch_out_b, lanes 64:84 =
#                        pitch_emb @ dur_out_W[:, :16]^T + dur_out_b
#   w_ref   : (64, 128)  rows 0:32 = W_hh^T, rows 32:64 = packed [pitch|dur] head weights
#   hc0_ref : (2, 32)    initial [h; c]
#   out_ref : (T_pad, 128) packed head logits per step
#   hc_ref  : (2, 32)    final [h; c]
# --------------------------------------------------------------------------------------
def note_decoder_seq_kernel(idx_ref, pg_ref, dg_ref, tp_ref, w_ref, hc0_ref,
                            out_ref, hc_ref,
                            xg_scr, tp_scr, h_scr, *, seq_len):
    H = HIDDEN

    # Zero-init scratch so the padded rows of the output slab stay finite.
    h_scr[...] = jnp.zeros_like(h_scr)
    tp_scr[...] = jnp.zeros_like(tp_scr)

    # ---- Prologue: gather all non-recurrent per-step rows (off the serial chain). -----
    # Gate bias is pre-folded into pg rows; head biases are pre-folded into tp rows.
    @pl.loop(0, seq_len)
    def _gather(t):
        p_i = idx_ref[0, t]
        d_i = idx_ref[1, t]
        t_i = idx_ref[2, t]
        xg_scr[pl.ds(t, 1), :] = pg_ref[pl.ds(p_i, 1), :] + dg_ref[pl.ds(d_i, 1), :]
        tp_scr[pl.ds(t, 1), :] = tp_ref[pl.ds(t_i, 1), :]

    # ---- Serial LSTM recurrence: (h, c) carried as vreg loop-carry values. ------------
    w_hh = w_ref[0:H, :]                      # (H, 4H) recurrent weights (pre-transposed)
    h0 = hc0_ref[0:1, :]                      # (1, H)
    c0 = hc0_ref[1:2, :]                      # (1, H)

    def step(t, carry):
        h, c = carry
        # gates = x@W_ih^T + b_ih + b_hh  (pre-gathered)  + h@W_hh^T
        gates = xg_scr[pl.ds(t, 1), :] + jnp.dot(h, w_hh,
                                                 preferred_element_type=jnp.float32)
        # Apply both non-linearities across the full 128-lane gate vector (EUP slack),
        # then take static lane slices for [i, f, g, o] (PyTorch gate order).
        sg = jax.nn.sigmoid(gates)
        th = jnp.tanh(gates)
        i_g = sg[:, 0:H]
        f_g = sg[:, H:2 * H]
        g_g = th[:, 2 * H:3 * H]
        o_g = sg[:, 3 * H:4 * H]
        c_new = f_g * c + i_g * g_g
        h_new = o_g * jnp.tanh(c_new)
        h_scr[pl.ds(t, 1), :] = h_new         # store only; the heads are computed post-loop
        return (h_new, c_new)

    h_fin, c_fin = lax.fori_loop(0, seq_len, step, (h0, c0))

    hc_ref[0:1, :] = h_fin
    hc_ref[1:2, :] = c_fin

    # ---- Epilogue: both output heads in ONE batched MXU matmul, lane-dense store. -----
    head_w = w_ref[H:2 * H, :]                # (H, 128) [pitch head | dur head] on lanes
    out_ref[...] = (jnp.dot(h_scr[...], head_w, preferred_element_type=jnp.float32)
                    + tp_scr[...])


# --------------------------------------------------------------------------------------
# One-time parameter preparation (hoisted out of the per-call path).
# --------------------------------------------------------------------------------------
def prep_decoder_params(params):
    f32 = jnp.float32
    hp = jax.lax.Precision.HIGHEST
    pe = params["pitch_embedding"].astype(f32)        # (63, 16)
    de = params["dur_embedding"].astype(f32)          # (20, 16)
    w_ih = params["w_ih"].astype(f32)                 # (128, 32)
    w_hh = params["w_hh"].astype(f32)                 # (128, 32)
    pw = params["pitch_out_w"].astype(f32)            # (63, 32)
    dw = params["dur_out_w"].astype(f32)              # (20, 48)
    gate_b = (params["b_ih"] + params["b_hh"]).astype(f32)   # (128,)
    pitch_b = params["pitch_out_b"].astype(f32)               # (63,)
    dur_b = params["dur_out_b"].astype(f32)                   # (20,)

    # Embedding lookup followed by a linear layer == lookup into (E @ W^T).
    # All biases are folded into the gather tables (exactly one row of each per step).
    pitch_gate = jnp.dot(pe, w_ih[:, :PITCH_EMB].T, precision=hp) + gate_b   # (63, 128)
    dur_gate = jnp.dot(de, w_ih[:, PITCH_EMB:].T, precision=hp)              # (20, 128)
    tp_dur = jnp.dot(pe, dw[:, :PITCH_EMB].T, precision=hp) + dur_b          # (63, 20)

    pg_tbl = jnp.zeros((PITCH_ROWS, LANES), f32).at[:PITCH_INPUT].set(pitch_gate)
    dg_tbl = jnp.zeros((DUR_ROWS, LANES), f32).at[:DUR_INPUT].set(dur_gate)

    tp_rows = jnp.zeros((PITCH_INPUT, LANES), f32)
    tp_rows = tp_rows.at[:, :PITCH_INPUT].set(
        jnp.broadcast_to(pitch_b, (PITCH_INPUT, PITCH_INPUT)))
    tp_rows = tp_rows.at[:, DUR_OFF:DUR_OFF + DUR_INPUT].set(tp_dur)
    tp_tbl = jnp.zeros((PITCH_ROWS, LANES), f32).at[:PITCH_INPUT].set(tp_rows)

    # Packed lane-dense weight slab: [W_hh^T ; packed head weights].
    head_w = jnp.zeros((HIDDEN, LANES), f32)
    head_w = head_w.at[:, :PITCH_INPUT].set(pw.T)                               # pitch head
    head_w = head_w.at[:, DUR_OFF:DUR_OFF + DUR_INPUT].set(dw[:, PITCH_EMB:].T)  # dur head
    wslab = jnp.zeros((WSLAB_ROWS, LANES), f32)
    wslab = wslab.at[:HIDDEN, :].set(w_hh.T)
    wslab = wslab.at[HIDDEN:2 * HIDDEN, :].set(head_w)

    return {"pg_tbl": pg_tbl, "dg_tbl": dg_tbl, "tp_tbl": tp_tbl, "wslab": wslab}


# --------------------------------------------------------------------------------------
# Sequence decode: T teacher-forced steps in ONE pallas_call, ONE grid step.
# --------------------------------------------------------------------------------------
@jax.jit
def note_decoder_decode(prepped, pitch_idx, dur_idx, true_pitch, hn, cn):
    T = pitch_idx.shape[0]
    T_pad = max(8, ((T + 7) // 8) * 8)

    # (3, T): long axis last so SMEM padding stays ~32 bytes/step (not 512).
    idx = jnp.stack([pitch_idx.astype(jnp.int32),
                     dur_idx.astype(jnp.int32),
                     true_pitch.astype(jnp.int32)], axis=0)
    hc0 = jnp.concatenate([hn.reshape(1, HIDDEN), cn.reshape(1, HIDDEN)], axis=0)

    grid_spec = pltpu.PrefetchScalarGridSpec(
        num_scalar_prefetch=1,
        grid=(1,),
        in_specs=[
            # all operands resident in VMEM for the whole decode (one DMA each)
            pl.BlockSpec((PITCH_ROWS, LANES), lambda i, n: (0, 0)),   # pitch gate table
            pl.BlockSpec((DUR_ROWS, LANES), lambda i, n: (0, 0)),     # dur gate table
            pl.BlockSpec((PITCH_ROWS, LANES), lambda i, n: (0, 0)),   # true-pitch head table
            pl.BlockSpec((WSLAB_ROWS, LANES), lambda i, n: (0, 0)),   # packed weights
            pl.BlockSpec((2, HIDDEN), lambda i, n: (0, 0)),           # initial (h, c)
        ],
        out_specs=(
            pl.BlockSpec((T_pad, LANES), lambda i, n: (0, 0)),        # packed head logits
            pl.BlockSpec((2, HIDDEN), lambda i, n: (0, 0)),           # final (h, c)
        ),
        scratch_shapes=[
            pltpu.VMEM((T_pad, LANES), jnp.float32),    # pre-gathered x-gate rows (+bias)
            pltpu.VMEM((T_pad, LANES), jnp.float32),    # pre-gathered true-pitch head rows
            pltpu.VMEM((T_pad, HIDDEN), jnp.float32),   # per-step h for the batched head matmul
        ],
    )

    outs, hc = pl.pallas_call(
        partial(note_decoder_seq_kernel, seq_len=T),
        out_shape=(jax.ShapeDtypeStruct((T_pad, LANES), jnp.float32),
                   jax.ShapeDtypeStruct((2, HIDDEN), jnp.float32)),
        grid_spec=grid_spec,
        compiler_params=pltpu.CompilerParams(dimension_semantics=("arbitrary",)),
    )(idx,
      prepped["pg_tbl"], prepped["dg_tbl"], prepped["tp_tbl"],
      prepped["wslab"], hc0)

    pitch_out = outs[:T, :PITCH_INPUT]                          # (T, 63)
    dur_out = outs[:T, DUR_OFF:DUR_OFF + DUR_INPUT]             # (T, 20)
    hn_new = hc[0].reshape(1, 1, HIDDEN)
    cn_new = hc[1].reshape(1, 1, HIDDEN)
    return (pitch_out, dur_out), (hn_new, cn_new)


def note_decoder_forward(prepped, note, hn, cn, true_pitch):
    """Single-step API matching Note_decoder.forward (note=(pitch_idx, dur_idx))."""
    pitch_idx, dur_idx = note
    (p, d), (h, c) = note_decoder_decode(
        prepped,
        jnp.atleast_1d(pitch_idx), jnp.atleast_1d(dur_idx), jnp.atleast_1d(true_pitch),
        hn, cn)
    return (p, d), (h, c)          # p: (1,63), d: (1,20), h/c: (1,1,H)


# --------------------------------------------------------------------------------------
# Pure-JAX reference mirroring the PyTorch forward exactly (original param layout).
# --------------------------------------------------------------------------------------
def reference_forward(params, note, hn, cn, true_pitch):
    pitch_idx, dur_idx = note
    emb_pitch = params["pitch_embedding"][pitch_idx].reshape(1, -1)
    emb_dur = params["dur_embedding"][dur_idx].reshape(1, -1)
    emb_true_pitch = params["pitch_embedding"][true_pitch].reshape(1, -1)
    x = jnp.concatenate([emb_pitch, emb_dur], axis=-1)
    h = hn.reshape(1, HIDDEN)
    c = cn.reshape(1, HIDDEN)
    gates = x @ params["w_ih"].T + params["b_ih"] + h @ params["w_hh"].T + params["b_hh"]
    H = HIDDEN
    i_g = jax.nn.sigmoid(gates[:, 0:H])
    f_g = jax.nn.sigmoid(gates[:, H:2 * H])
    g_g = jnp.tanh(gates[:, 2 * H:3 * H])
    o_g = jax.nn.sigmoid(gates[:, 3 * H:4 * H])
    c_new = f_g * c + i_g * g_g
    h_new = o_g * jnp.tanh(c_new)
    pitch_out = h_new @ params["pitch_out_w"].T + params["pitch_out_b"]
    dur_in = jnp.concatenate([emb_true_pitch, h_new], axis=-1)
    dur_out = dur_in @ params["dur_out_w"].T + params["dur_out_b"]
    return ((pitch_out, dur_out),
            (h_new.reshape(1, 1, HIDDEN), c_new.reshape(1, 1, HIDDEN)))


def init_params(key):
    ks = jax.random.split(key, 10)

    def u(k, shape, bound):
        return jax.random.uniform(k, shape, jnp.float32, -bound, bound)

    lstm_std = 1.0 / np.sqrt(HIDDEN)
    dur_std = 1.0 / np.sqrt(PITCH_EMB + HIDDEN)
    return {
        # nn.Embedding: N(0, 1)
        "pitch_embedding": jax.random.normal(ks[0], (PITCH_INPUT, PITCH_EMB), jnp.float32),
        "dur_embedding": jax.random.normal(ks[1], (DUR_INPUT, DUR_EMB), jnp.float32),
        # nn.LSTM: U(-1/sqrt(H), 1/sqrt(H)), gate order [i, f, g, o]
        "w_ih": u(ks[2], (4 * HIDDEN, INPUT_SIZE), lstm_std),
        "w_hh": u(ks[3], (4 * HIDDEN, HIDDEN), lstm_std),
        "b_ih": u(ks[4], (4 * HIDDEN,), lstm_std),
        "b_hh": u(ks[5], (4 * HIDDEN,), lstm_std),
        # nn.Linear(hidden, 63)
        "pitch_out_w": u(ks[6], (PITCH_INPUT, HIDDEN), lstm_std),
        "pitch_out_b": u(ks[7], (PITCH_INPUT,), lstm_std),
        # nn.Linear(PE + hidden, 20)
        "dur_out_w": u(ks[8], (DUR_INPUT, PITCH_EMB + HIDDEN), dur_std),
        "dur_out_b": u(ks[9], (DUR_INPUT,), dur_std),
    }


if __name__ == "__main__":
    key = jax.random.PRNGKey(0)
    pkey, hkey, ckey, nkey = jax.random.split(key, 4)
    params = init_params(pkey)
    prepped = prep_decoder_params(params)      # one-time weight packing / embedding folding

    hn = jax.random.normal(hkey, (1, 1, HIDDEN), jnp.float32) * 0.1
    cn = jax.random.normal(ckey, (1, 1, HIDDEN), jnp.float32) * 0.1

    # --- single step (exactly the module's forward signature) -------------------------
    note = (jnp.array(5, dtype=jnp.int32), jnp.array(3, dtype=jnp.int32))
    true_pitch = jnp.array(12, dtype=jnp.int32)
    (p1, d1), (h1, c1) = note_decoder_forward(prepped, note, hn, cn, true_pitch)
    jax.block_until_ready((p1, d1, h1, c1))

    (p_ref, d_ref), (h_ref, c_ref) = reference_forward(params, note, hn, cn, true_pitch)
    assert p1.shape == (1, PITCH_INPUT) and d1.shape == (1, DUR_INPUT)
    assert h1.shape == (1, 1, HIDDEN) and c1.shape == (1, 1, HIDDEN)
    np.testing.assert_allclose(np.asarray(p1), np.asarray(p_ref), rtol=1e-4, atol=1e-4)
    np.testing.assert_allclose(np.asarray(d1), np.asarray(d_ref), rtol=1e-4, atol=1e-4)
    np.testing.assert_allclose(np.asarray(h1), np.asarray(h_ref), rtol=1e-4, atol=1e-4)
    np.testing.assert_allclose(np.asarray(c1), np.asarray(c_ref), rtol=1e-4, atol=1e-4)

    # --- T=8 teacher-forced decode steps, whole sequence in ONE kernel invocation ------
    T = 8
    k1, k2, k3 = jax.random.split(nkey, 3)
    pitch_seq = jax.random.randint(k1, (T,), 0, PITCH_INPUT, dtype=jnp.int32)
    dur_seq = jax.random.randint(k2, (T,), 0, DUR_INPUT, dtype=jnp.int32)
    tp_seq = jax.random.randint(k3, (T,), 0, PITCH_INPUT, dtype=jnp.int32)

    (p_seq, d_seq), (h_seq, c_seq) = note_decoder_decode(prepped, pitch_seq, dur_seq,
                                                         tp_seq, hn, cn)
    jax.block_until_ready((p_seq, d_seq, h_seq, c_seq))

    # reference: python loop of the per-step reference, carrying state
    h_r, c_r = hn, cn
    p_list, d_list = [], []
    for t in range(T):
        (pr, dr), (h_r, c_r) = reference_forward(
            params, (pitch_seq[t], dur_seq[t]), h_r, c_r, tp_seq[t])
        p_list.append(pr)
        d_list.append(dr)
    p_ref_seq = jnp.concatenate(p_list, axis=0)
    d_ref_seq = jnp.concatenate(d_list, axis=0)

    np.testing.assert_allclose(np.asarray(p_seq), np.asarray(p_ref_seq), rtol=1e-4, atol=1e-4)
    np.testing.assert_allclose(np.asarray(d_seq), np.asarray(d_ref_seq), rtol=1e-4, atol=1e-4)
    np.testing.assert_allclose(np.asarray(h_seq), np.asarray(h_r), rtol=1e-4, atol=1e-4)
    np.testing.assert_allclose(np.asarray(c_seq), np.asarray(c_r), rtol=1e-4, atol=1e-4)

    print("KERNEL_OK")
</pallas_src>

<mosaic_0001>
module attributes {stable_mosaic.version = 11 : i64} {
  func.func @note_decoder_seq_kernel(%arg0: i32, %arg1: memref<3x1xi32, #tpu.memory_space<smem>>, %arg2: memref<64x128xf32, #tpu.memory_space<vmem>>, %arg3: memref<24x128xf32, #tpu.memory_space<vmem>>, %arg4: memref<64x128xf32, #tpu.memory_space<vmem>>, %arg5: memref<64x128xf32, #tpu.memory_space<vmem>>, %arg6: memref<2x32xf32, #tpu.memory_space<vmem>>, %arg7: memref<8x128xf32, #tpu.memory_space<vmem>>, %arg8: memref<2x32xf32, #tpu.memory_space<vmem>>, %arg9: memref<8x128xf32, #tpu.memory_space<vmem>>, %arg10: memref<8x128xf32, #tpu.memory_space<vmem>>, %arg11: memref<8x32xf32, #tpu.memory_space<vmem>>) attributes {dimension_semantics = [#tpu.dimension_semantics<arbitrary>], iteration_bounds = array<i64: 1>, scalar_prefetch = 1 : i64, scratch_operands = 3 : i64, tpu.core_type = #tpu.core_type<tc>, window_params = [{pipeline_mode = #tpu.pipeline_mode<synchronous>, transform_indices = @transform_0, window_bounds = array<i64: 64, 128>}, {pipeline_mode = #tpu.pipeline_mode<synchronous>, transform_indices = @transform_1, window_bounds = array<i64: 24, 128>}, {pipeline_mode = #tpu.pipeline_mode<synchronous>, transform_indices = @transform_2, window_bounds = array<i64: 64, 128>}, {pipeline_mode = #tpu.pipeline_mode<synchronous>, transform_indices = @transform_3, window_bounds = array<i64: 64, 128>}, {pipeline_mode = #tpu.pipeline_mode<synchronous>, transform_indices = @transform_4, window_bounds = array<i64: 2, 32>}, {pipeline_mode = #tpu.pipeline_mode<synchronous>, transform_indices = @transform_5, window_bounds = array<i64: 8, 128>}, {pipeline_mode = #tpu.pipeline_mode<synchronous>, transform_indices = @transform_6, window_bounds = array<i64: 2, 32>}]} {
    %cst = arith.constant 0.000000e+00 : f32
    %0 = vector.broadcast %cst : f32 to vector<8x32xf32>
    %c0 = arith.constant 0 : index
    %c0_0 = arith.constant 0 : index
    %1 = vector.load %arg11[%c0, %c0_0] : memref<8x32xf32, #tpu.memory_space<vmem>>, vector<8x32xf32>
    tpu.vector_store %arg11[%c0, %c0_0], %0 {strides = array<i32>} : memref<8x32xf32, #tpu.memory_space<vmem>>, vector<8x32xf32>,
    %cst_1 = arith.constant 0.000000e+00 : f32
    %2 = vector.broadcast %cst_1 : f32 to vector<8x128xf32>
    %c0_2 = arith.constant 0 : index
    %c0_3 = arith.constant 0 : index
    %3 = vector.load %arg10[%c0_2, %c0_3] : memref<8x128xf32, #tpu.memory_space<vmem>>, vector<8x128xf32>
    tpu.vector_store %arg10[%c0_2, %c0_3], %2 {strides = array<i32>} : memref<8x128xf32, #tpu.memory_space<vmem>>, vector<8x128xf32>,
    %c0_i32 = arith.constant 0 : i32
    %c1_i32 = arith.constant 1 : i32
    %4 = arith.muli %c0_i32, %c1_i32 : i32
    %c0_i32_4 = arith.constant 0 : i32
    %5 = arith.addi %c0_i32_4, %4 : i32
    %c0_5 = arith.constant 0 : index
    %6 = arith.index_cast %5 : i32 to index
    %7 = memref.load %arg1[%c0_5, %6] : memref<3x1xi32, #tpu.memory_space<smem>>
    %c1 = arith.constant 1 : index
    %8 = arith.index_cast %5 : i32 to index
    %9 = memref.load %arg1[%c1, %8] : memref<3x1xi32, #tpu.memory_space<smem>>
    %c2 = arith.constant 2 : index
    %10 = arith.index_cast %5 : i32 to index
    %11 = memref.load %arg1[%c2, %10] : memref<3x1xi32, #tpu.memory_space<smem>>
    %12 = arith.index_cast %7 : i32 to index
    %c0_6 = arith.constant 0 : index
    %13 = vector.load %arg2[%12, %c0_6] : memref<64x128xf32, #tpu.memory_space<vmem>>, vector<1x128xf32>
    %14 = arith.index_cast %9 : i32 to index
    %c0_7 = arith.constant 0 : index
    %15 = vector.load %arg3[%14, %c0_7] : memref<24x128xf32, #tpu.memory_space<vmem>>, vector<1x128xf32>
    %16 = arith.addf %13, %15 : vector<1x128xf32>
    %17 = arith.index_cast %5 : i32 to index
    %c0_8 = arith.constant 0 : index
    %18 = vector.load %arg9[%17, %c0_8] : memref<8x128xf32, #tpu.memory_space<vmem>>, vector<1x128xf32>
    tpu.vector_store %arg9[%17, %c0_8], %16 {strides = array<i32>} : memref<8x128xf32, #tpu.memory_space<vmem>>, vector<1x128xf32>,
    %19 = arith.index_cast %11 : i32 to index
    %c0_9 = arith.constant 0 : index
    %20 = vector.load %arg4[%19, %c0_9] : memref<64x128xf32, #tpu.memory_space<vmem>>, vector<1x128xf32>
    %21 = arith.index_cast %5 : i32 to index
    %c0_10 = arith.constant 0 : index
    %22 = vector.load %arg10[%21, %c0_10] : memref<8x128xf32, #tpu.memory_space<vmem>>, vector<1x128xf32>
    tpu.vector_store %arg10[%21, %c0_10], %20 {strides = array<i32>} : memref<8x128xf32, #tpu.memory_space<vmem>>, vector<1x128xf32>,
    %c1_i32_11 = arith.constant 1 : i32
    %c0_12 = arith.constant 0 : index
    %c0_13 = arith.constant 0 : index
    %23 = vector.load %arg5[%c0_12, %c0_13] : memref<64x128xf32, #tpu.memory_space<vmem>>, vector<32x128xf32>
    %c0_14 = arith.constant 0 : index
    %c0_15 = arith.constant 0 : index
    %24 = vector.load %arg6[%c0_14, %c0_15] : memref<2x32xf32, #tpu.memory_space<vmem>>, vector<1x32xf32>
    %c1_16 = arith.constant 1 : index
    %c0_17 = arith.constant 0 : index
    %25 = vector.load %arg6[%c1_16, %c0_17] : memref<2x32xf32, #tpu.memory_space<vmem>>, vector<1x32xf32>
    %c0_i32_18 = arith.constant 0 : i32
    %26 = arith.index_cast %c0_i32_18 : i32 to index
    %c0_19 = arith.constant 0 : index
    %27 = vector.load %arg9[%26, %c0_19] : memref<8x128xf32, #tpu.memory_space<vmem>>, vector<1x128xf32>
    %cst_20 = arith.constant dense<0.000000e+00> : vector<1x128xf32>
    %28 = tpu.matmul %24, %23, %cst_20 {dimension_numbers = #tpu.dot_dimension_numbers<[1], [0], [0], [1], [0, 0, 1, 1], [], []>} : vector<1x32xf32>, vector<32x128xf32>, vector<1x128xf32> -> vector<1x128xf32>
    %29 = arith.addf %27, %28 : vector<1x128xf32>
    %30 = arith.negf %29 : vector<1x128xf32>
    %31 = math.exp %30 : vector<1x128xf32>
    %cst_21 = arith.constant 1.000000e+00 : f32
    %32 = vector.broadcast %cst_21 : f32 to vector<1x128xf32>
    %33 = arith.addf %32, %31 : vector<1x128xf32>
    %34 = arith.divf %32, %33 : vector<1x128xf32>
    %35 = math.tanh %29 : vector<1x128xf32>
    %36 = vector.extract_strided_slice %34 {offsets = [0, 0], sizes = [1, 32], strides = [1, 1]} : vector<1x128xf32> to vector<1x32xf32>
    %37 = vector.extract_strided_slice %34 {offsets = [0, 32], sizes = [1, 32], strides = [1, 1]} : vector<1x128xf32> to vector<1x32xf32>
    %38 = vector.extract_strided_slice %35 {offsets = [0, 64], sizes = [1, 32], strides = [1, 1]} : vector<1x128xf32> to vector<1x32xf32>
    %39 = vector.extract_strided_slice %34 {offsets = [0, 96], sizes = [1, 32], strides = [1, 1]} : vector<1x128xf32> to vector<1x32xf32>
    %40 = arith.mulf %37, %25 : vector<1x32xf32>
    %41 = arith.mulf %36, %38 : vector<1x32xf32>
    %42 = arith.addf %40, %41 : vector<1x32xf32>
    %43 = math.tanh %42 : vector<1x32xf32>
    %44 = arith.mulf %39, %43 : vector<1x32xf32>
    %45 = arith.index_cast %c0_i32_18 : i32 to index
    %c0_22 = arith.constant 0 : index
    %46 = vector.load %arg11[%45, %c0_22] : memref<8x32xf32, #tpu.memory_space<vmem>>, vector<1x32xf32>
    tpu.vector_store %arg11[%45, %c0_22], %44 {strides = array<i32>} : memref<8x32xf32, #tpu.memory_space<vmem>>, vector<1x32xf32>,
    %c1_i32_23 = arith.constant 1 : i32
    %c0_24 = arith.constant 0 : index
    %c0_25 = arith.constant 0 : index
    %47 = vector.load %arg8[%c0_24, %c0_25] : memref<2x32xf32, #tpu.memory_space<vmem>>, vector<1x32xf32>
    tpu.vector_store %arg8[%c0_24, %c0_25], %44 {strides = array<i32>} : memref<2x32xf32, #tpu.memory_space<vmem>>, vector<1x32xf32>,
    %c1_26 = arith.constant 1 : index
    %c0_27 = arith.constant 0 : index
    %48 = vector.load %arg8[%c1_26, %c0_27] : memref<2x32xf32, #tpu.memory_space<vmem>>, vector<1x32xf32>
    tpu.vector_store %arg8[%c1_26, %c0_27], %42 {strides = array<i32>} : memref<2x32xf32, #tpu.memory_space<vmem>>, vector<1x32xf32>,
    %c32 = arith.constant 32 : index
    %c0_28 = arith.constant 0 : index
    %49 = vector.load %arg5[%c32, %c0_28] : memref<64x128xf32, #tpu.memory_space<vmem>>, vector<32x128xf32>
    %c0_29 = arith.constant 0 : index
    %c0_30 = arith.constant 0 : index
    %50 = vector.load %arg11[%c0_29, %c0_30] : memref<8x32xf32, #tpu.memory_space<vmem>>, vector<8x32xf32>
    %cst_31 = arith.constant dense<0.000000e+00> : vector<8x128xf32>
    %51 = tpu.matmul %50, %49, %cst_31 {dimension_numbers = #tpu.dot_dimension_numbers<[1], [0], [0], [1], [0, 0, 1, 1], [], []>} : vector<8x32xf32>, vector<32x128xf32>, vector<8x128xf32> -> vector<8x128xf32>
    %c0_32 = arith.constant 0 : index
    %c0_33 = arith.constant 0 : index
    %52 = vector.load %arg10[%c0_32, %c0_33] : memref<8x128xf32, #tpu.memory_space<vmem>>, vector<8x128xf32>
    %53 = arith.addf %51, %52 : vector<8x128xf32>
    %c0_34 = arith.constant 0 : index
    %c0_35 = arith.constant 0 : index
    %54 = vector.load %arg7[%c0_34, %c0_35] : memref<8x128xf32, #tpu.memory_space<vmem>>, vector<8x128xf32>
    tpu.vector_store %arg7[%c0_34, %c0_35], %53 {strides = array<i32>} : memref<8x128xf32, #tpu.memory_space<vmem>>, vector<8x128xf32>,
    return
  }
  func.func @transform_0(%arg0: i32, %arg1: memref<3x1xi32, #tpu.memory_space<smem>>) -> (i32, i32) {
    %c0_i32 = arith.constant 0 : i32
    %c0_i32_0 = arith.constant 0 : i32
    %c0_i32_1 = arith.constant 0 : i32
    return %c0_i32, %c0_i32_0 : i32, i32
  }
  func.func @transform_1(%arg0: i32, %arg1: memref<3x1xi32, #tpu.memory_space<smem>>) -> (i32, i32) {
    %c0_i32 = arith.constant 0 : i32
    %c0_i32_0 = arith.constant 0 : i32
    %c0_i32_1 = arith.constant 0 : i32
    return %c0_i32, %c0_i32_0 : i32, i32
  }
  func.func @transform_2(%arg0: i32, %arg1: memref<3x1xi32, #tpu.memory_space<smem>>) -> (i32, i32) {
    %c0_i32 = arith.constant 0 : i32
    %c0_i32_0 = arith.constant 0 : i32
    %c0_i32_1 = arith.constant 0 : i32
    return %c0_i32, %c0_i32_0 : i32, i32
  }
  func.func @transform_3(%arg0: i32, %arg1: memref<3x1xi32, #tpu.memory_space<smem>>) -> (i32, i32) {
    %c0_i32 = arith.constant 0 : i32
    %c0_i32_0 = arith.constant 0 : i32
    %c0_i32_1 = arith.constant 0 : i32
    return %c0_i32, %c0_i32_0 : i32, i32
  }
  func.func @transform_4(%arg0: i32, %arg1: memref<3x1xi32, #tpu.memory_space<smem>>) -> (i32, i32) {
    %c0_i32 = arith.constant 0 : i32
    %c0_i32_0 = arith.constant 0 : i32
    %c0_i32_1 = arith.constant 0 : i32
    return %c0_i32, %c0_i32_0 : i32, i32
  }
  func.func @transform_5(%arg0: i32, %arg1: memref<3x1xi32, #tpu.memory_space<smem>>) -> (i32, i32) {
    %c0_i32 = arith.constant 0 : i32
    %c0_i32_0 = arith.constant 0 : i32
    %c0_i32_1 = arith.constant 0 : i32
    return %c0_i32, %c0_i32_0 : i32, i32
  }
  func.func @transform_6(%arg0: i32, %arg1: memref<3x1xi32, #tpu.memory_space<smem>>) -> (i32, i32) {
    %c0_i32 = arith.constant 0 : i32
    %c0_i32_0 = arith.constant 0 : i32
    %c0_i32_1 = arith.constant 0 : i32
    return %c0_i32, %c0_i32_0 : i32, i32
  }
}

</mosaic_0001>

<llo_original>
// kernel: note_decoder_decode.1
$region0: #{note_decoder_decode.1}
  #allocation0 [shape = 'u32[]', space=smem, size = 0x4, offset = 0x4, fixed_abs, tag = 'smem constant byte address 0x4 - core index']
  #allocation1 [shape = 'u32[144,128]{1,0:T(1,128)}', space=vmem, size = 0x12000, scoped, tag = 'internal scratch']
  #allocation2 [shape = 'f32[8,128]{1,0:T(8,128)}', space=vmem, size = 0x1000, scoped, tag = 'scratch operand']
  #allocation3 [shape = 'f32[8,128]{1,0:T(8,128)}', space=vmem, size = 0x1000, scoped, tag = 'scratch operand']
  #allocation4 [shape = 'f32[8,32]{1,0:T(8,128)}', space=vmem, size = 0x1000, scoped, tag = 'scratch operand']
  #allocation5 [shape = 's32[1]{0}', space=sflag, size = 0x4, scoped, tag = 'scoped memory for note_decoder_decode.1']
  #allocation6 [shape = 'u8[2048]{0}', space=smem, size = 0x800, scoped, tag = 'prefetched SMEM operand 0']
  %s0 = inlined_call_operand.vmem [shape: s32[3,1], index: 0, kind: input, shape index: {}]
  %s1 = inlined_call_operand.hbm [shape: f32[64,128], index: 1, kind: input, shape index: {}]
  %s2 = inlined_call_operand.vmem [shape: f32[24,128], index: 2, kind: input, shape index: {}]
  %s3 = inlined_call_operand.hbm [shape: f32[64,128], index: 3, kind: input, shape index: {}]
  %s4 = inlined_call_operand.hbm [shape: f32[64,128], index: 4, kind: input, shape index: {}]
  %s5 = inlined_call_operand.vmem [shape: f32[2,32], index: 5, kind: input, shape index: {}]
  %s6 = inlined_call_operand.vmem [shape: f32[8,128], index: 6, kind: output, shape index: {0}]
  %s7 = inlined_call_operand.vmem [shape: f32[2,32], index: 7, kind: output, shape index: {1}]
  %8 = xla_tuple %s6, %s7
  %s9 = sld [smem:[#allocation0]]
  $region50: #{note_decoder_decode.1} parent=0
    _
  %s11 = ssub.s32 1, %s9
  %s12 = scalar_select 0, %s11, %s9
  %s13 = sshll.u32 %s0, 4
  %s14 = int_to_ptr.vmem [resolvable:$true] %s13
  %16 = dma.vmem_to_smem %s14, 64, [#allocation6], [#allocation5]
  %17 = dma.done [#allocation5], 64
  %18 = sfence
  $region1: #{note_decoder_decode.1} parent=0
    #allocation7 [shape = 'u8[32768]{0}', space=vmem, size = 0x8000, scoped, tag = 'input window, operand 1, single buffered']
    #allocation8 [shape = 's32[1]{0}', space=sflag, size = 0x4, scoped, tag = 'scoped memory for note_decoder_decode.1']
    #allocation9 [shape = 'u8[32768]{0}', space=vmem, size = 0x8000, scoped, tag = 'input window, operand 3, single buffered']
    #allocation10 [shape = 's32[1]{0}', space=sflag, size = 0x4, scoped, tag = 'scoped memory for note_decoder_decode.1']
    #allocation11 [shape = 'u8[32768]{0}', space=vmem, size = 0x8000, scoped, tag = 'input window, operand 4, single buffered']
    %19 = vsyncpa [#allocation8], 0
    %20 = vsyncpa [#allocation10], 0
    // Predicated region
    $region2: #{note_decoder_decode.1} parent=1 // pred_check
      _
    $region3: #{note_decoder_decode.1} parent=1 // pred_check_branch
      %22 = sbr.rel (0) target = $region5
    $region4: #{note_decoder_decode.1} parent=1 // pred_region
      %s24 = ssub.s32 1024, 1024
      %25 = vsyncadd [#allocation8], %s24
      %s26 = sshll.u32 [#allocation7], 4
      %s27 = int_to_ptr.vmem [resolvable:$true] %s26
      %32 = dma.hbm_to_vmem [thread:$0]  %s1, 1024, %s27, [#allocation8], 128, 128, 8
    $region5: #{note_decoder_decode.1} parent=1 // pred_fallthru
      _
    // Predicated region
    $region6: #{note_decoder_decode.1} parent=1 // pred_check
      _
    $region7: #{note_decoder_decode.1} parent=1 // pred_check_branch
      %34 = sbr.rel (0) target = $region9
    $region8: #{note_decoder_decode.1} parent=1 // pred_region
      _
    $region9: #{note_decoder_decode.1} parent=1 // pred_fallthru
      _
    // Predicated region
    $region10: #{note_decoder_decode.1} parent=1 // pred_check
      _
    $region11: #{note_decoder_decode.1} parent=1 // pred_check_branch
      %36 = sbr.rel (0) target = $region13
    $region12: #{note_decoder_decode.1} parent=1 // pred_region
      %s38 = ssub.s32 1024, 1024
      %39 = vsyncadd [#allocation10], %s38
      %s40 = sshll.u32 [#allocation9], 4
      %s41 = int_to_ptr.vmem [resolvable:$true] %s40
      %46 = dma.hbm_to_vmem [thread:$0]  %s3, 1024, %s41, [#allocation10], 128, 128, 8
    $region13: #{note_decoder_decode.1} parent=1 // pred_fallthru
      _
    // Predicated region
    $region14: #{note_decoder_decode.1} parent=1 // pred_check
      _
    $region15: #{note_decoder_decode.1} parent=1 // pred_check_branch
      %48 = sbr.rel (0) target = $region17
    $region16: #{note_decoder_decode.1} parent=1 // pred_region
      %s50 = ssub.s32 1024, 1024
      %51 = vsyncadd [#allocation10], %s50
      %s52 = sshll.u32 [#allocation11], 4
      %s53 = int_to_ptr.vmem [resolvable:$true] %s52
      %58 = dma.hbm_to_vmem [thread:$0]  %s4, 1024, %s53, [#allocation10], 128, 128, 8
    $region17: #{note_decoder_decode.1} parent=1 // pred_fallthru
      _
    // Predicated region
    $region18: #{note_decoder_decode.1} parent=1 // pred_check
      _
    $region19: #{note_decoder_decode.1} parent=1 // pred_check_branch
      %60 = sbr.rel (0) target = $region21
    $region20: #{note_decoder_decode.1} parent=1 // pred_region
      _
    $region21: #{note_decoder_decode.1} parent=1 // pred_fallthru
      _
    // Predicated region
    $region22: #{note_decoder_decode.1} parent=1 // pred_check
      _
    $region23: #{note_decoder_decode.1} parent=1 // pred_check_branch
      %62 = sbr.rel (0) target = $region25
    $region24: #{note_decoder_decode.1} parent=1 // pred_region
      %63 = dma.done [#allocation8], 1024
    $region25: #{note_decoder_decode.1} parent=1 // pred_fallthru
      _
    // Predicated region
    $region26: #{note_decoder_decode.1} parent=1 // pred_check
      _
    $region27: #{note_decoder_decode.1} parent=1 // pred_check_branch
      %65 = sbr.rel (0) target = $region29
    $region28: #{note_decoder_decode.1} parent=1 // pred_region
      %66 = dma.done [#allocation10], 1024
    $region29: #{note_decoder_decode.1} parent=1 // pred_fallthru
      _
    // Predicated region
    $region30: #{note_decoder_decode.1} parent=1 // pred_check
      _
    $region31: #{note_decoder_decode.1} parent=1 // pred_check_branch
      %68 = sbr.rel (0) target = $region33
    $region32: #{note_decoder_decode.1} parent=1 // pred_region
      %69 = dma.done [#allocation10], 1024
    $region33: #{note_decoder_decode.1} parent=1 // pred_fallthru
      _
    %vm70 = vcmask 261120
    %71 = vst.msk [vmem:[#allocation4] sm:$0xff] %vm70, 0.0
    %72 = vst [vmem:[#allocation3] sm:$0xff] 0.0
    %s73 = sld [smem:[#allocation6]]
    %s74 = sld [smem:[#allocation6 + $0x80]]
    %s75 = sld [smem:[#allocation6 + $0x100]]
    %s76 = scalar_lea.vmem [#allocation7], %s73
    %v77 = vld [vmem:[%s76] sm:$0x1]
    %s78 = scalar_lea.vmem %s2, %s74
    %v79 = vld [vmem:[%s78] sm:$0x1]
    %v80 = vadd.f32 %v77, %v79
    %81 = vst [vmem:[#allocation2] sm:$0x1] %v80
    %s82 = scalar_lea.vmem [#allocation9], %s75
    %v83 = vld [vmem:[%s82] sm:$0x1]
    %84 = vst [vmem:[#allocation3] sm:$0x1] %v83
    %v85 = vld [vmem:[#allocation11] sm:$0xff]
    %v86 = vld [vmem:[#allocation11 + $0x8] sm:$0xff]
    %v87 = vld [vmem:[#allocation11 + $0x10] sm:$0xff]
    %v88 = vld [vmem:[#allocation11 + $0x18] sm:$0xff]
    %v89 = vld [vmem:[%s5] sm:$0x1]
    %v90 = vld [vmem:[%s5 + $0x1] sm:$0x1]
    %v91 = vld [vmem:[#allocation2] sm:$0x1]
    %v93 = vsel %vm70, %v89, 0
    %95 = vmatprep.subr.mxu0 0.0
    %96 = vmatpush1.msra.mxu0 %v85
    %97 = vmatprep.subr.mxu0 0.0
    %98 = vmatpush1.msra.mxu0 %v86
    %99 = vmatprep.subr.mxu0 0.0
    %100 = vmatpush1.msra.mxu0 %v87
    %101 = vmatprep.subr.mxu0 0.0
    %102 = vmatpush1.msra.mxu0 %v88
    %103 = vmatprep.subr.mxu0 0.0
    %104 = vmatpush1.msra.mxu0 0.0
    %105 = vmatprep.subr.mxu0 0.0
    %106 = vmatpush1.msra.mxu0 0.0
    %107 = vmatprep.subr.mxu0 0.0
    %108 = vmatpush1.msra.mxu0 0.0
    %109 = vmatprep.subr.mxu0 0.0
    %110 = vmatpush1.msra.mxu0 0.0
    %111 = vmatprep.subr.mxu0 0.0
    %112 = vmatpush1.msra.mxu0 0.0
    %113 = vmatprep.subr.mxu0 0.0
    %114 = vmatpush1.msra.mxu0 0.0
    %115 = vmatprep.subr.mxu0 0.0
    %116 = vmatpush1.msra.mxu0 0.0
    %117 = vmatprep.subr.mxu0 0.0
    %118 = vmatpush1.msra.mxu0 0.0
    %119 = vmatprep.subr.mxu0 0.0
    %120 = vmatpush1.msra.mxu0 0.0
    %121 = vmatprep.subr.mxu0 0.0
    %122 = vmatpush1.msra.mxu0 0.0
    %123 = vmatprep.subr.mxu0 0.0
    %124 = vmatpush1.msra.mxu0 0.0
    %125 = vmatprep.subr.mxu0 0.0
    %126 = vmatpush1.msra.mxu0 0.0
    %127 = vmatprep.subr.mxu0 0.0
    %128 = vmatpush1.msra.mxu0 0.0
    %129 = vmatprep.subr.mxu0 0.0
    %130 = vmatpush1.msra.mxu0 0.0
    %131 = vmatprep.subr.mxu0 0.0
    %132 = vmatpush1.msra.mxu0 0.0
    %133 = vmatprep.subr.mxu0 0.0
    %134 = vmatpush1.msra.mxu0 0.0
    %135 = vmatprep.subr.mxu0 0.0
    %136 = vmatpush1.msra.mxu0 0.0
    %137 = vmatprep.subr.mxu0 0.0
    %138 = vmatpush1.msra.mxu0 0.0
    %139 = vmatprep.subr.mxu0 0.0
    %140 = vmatpush1.msra.mxu0 0.0
    %141 = vmatprep.subr.mxu0 0.0
    %142 = vmatpush1.msra.mxu0 0.0
    %143 = vmatprep.subr.mxu0 0.0
    %144 = vmatpush1.msra.mxu0 0.0
    %145 = vmatprep.subr.mxu0 0.0
    %146 = vmatpush1.msra.mxu0 0.0
    %147 = vmatprep.subr.mxu0 0.0
    %148 = vmatpush1.msra.mxu0 0.0
    %149 = vmatprep.subr.mxu0 0.0
    %150 = vmatpush1.msra.mxu0 0.0
    %151 = vmatprep.subr.mxu0 0.0
    %152 = vmatpush1.msra.mxu0 0.0
    %153 = vmatprep.subr.mxu0 0.0
    %154 = vmatpush1.msra.mxu0 0.0
    %155 = vmatprep.subr.mxu0 0.0
    %156 = vmatpush1.msra.mxu0 0.0
    %157 = vmatprep.subr.mxu0 0.0
    %158 = vmatpush1.msra.mxu0 0.0
    %159 = vmatprep.mubr.f32.mxu0 0.0
    %160 = vmatmul.mubr.f32.gmra.mrb[0].mxu0 %v93
    %v161 = vpop.f32.mrb[0].mxu0
    %v162 = vadd.f32 0.0, %v161
    %v163 = vpop.f32.mrb[0].mxu0
    %164 = vdwg.mxu0
    %v165 = vadd.f32 %v91, %v162
    %v166 = vxor.u32 %v165, 2147483648
    %v167 = vmul.f32 %v166, 1.442695
    %v168 = vpow.pop %v167
    %v169 = vadd.f32 %v168, 1.0
    %v170 = vrcp.pop %v169
    %v171 = vmul.f32 1.0, %v170
    %v172 = vtanh.pop %v165
    %174 = vrot.lane.b32.xlu0 %v90, 32
    %v175 = vpop.permute.xlu0 %174
    %v177 = vmul.f32 %v171, %v175
    %179 = vrot.lane.b32.xlu0 %v172, 64
    %v180 = vpop.permute.xlu0 %179
    %v182 = vmul.f32 %v171, %v180
    %184 = vrot.lane.b32.xlu0 %v182, 32
    %v185 = vpop.permute.xlu0 %184
    %v187 = vadd.f32 %v177, %v185
    %v188 = vtanh.pop %v187
    %190 = vrot.lane.b32.xlu0 %v188, 64
    %v191 = vpop.permute.xlu0 %190
    %v193 = vmul.f32 %v171, %v191
    %195 = vrot.lane.b32.xlu0 %v193, 32
    %v196 = vpop.permute.xlu0 %195
    %vm198 = vcmask 253952
    %199 = vst.msk [vmem:[#allocation4] sm:$0x1] %vm198, %v196
    %200 = vst.msk [vmem:[%s7] sm:$0x1] %vm198, %v196
    %202 = vrot.lane.b32.xlu0 %v187, 96
    %v203 = vpop.permute.xlu0 %202
    %205 = vst.msk [vmem:[%s7 + $0x1] sm:$0x1] %vm198, %v203
    %v206 = vld [vmem:[#allocation11 + $0x20] sm:$0xff]
    %v207 = vld [vmem:[#allocation11 + $0x28] sm:$0xff]
    %v208 = vld [vmem:[#allocation11 + $0x30] sm:$0xff]
    %v209 = vld [vmem:[#allocation11 + $0x38] sm:$0xff]
    %v210 = vld [vmem:[#allocation4] sm:$0xff]
    %v211 = vld [vmem:[#allocation3] sm:$0xff]
    %v213 = vsel %vm70, %v210, 0
    %215 = vmatprep.subr.mxu0 0.0
    %216 = vmatpush1.msra.mxu0 %v206
    %217 = vmatprep.subr.mxu0 0.0
    %218 = vmatpush1.msra.mxu0 %v207
    %219 = vmatprep.subr.mxu0 0.0
    %220 = vmatpush1.msra.mxu0 %v208
    %221 = vmatprep.subr.mxu0 0.0
    %222 = vmatpush1.msra.mxu0 %v209
    %223 = vmatprep.subr.mxu0 0.0
    %224 = vmatpush1.msra.mxu0 0.0
    %225 = vmatprep.subr.mxu0 0.0
    %226 = vmatpush1.msra.mxu0 0.0
    %227 = vmatprep.subr.mxu0 0.0
    %228 = vmatpush1.msra.mxu0 0.0
    %229 = vmatprep.subr.mxu0 0.0
    %230 = vmatpush1.msra.mxu0 0.0
    %231 = vmatprep.subr.mxu0 0.0
    %232 = vmatpush1.msra.mxu0 0.0
    %233 = vmatprep.subr.mxu0 0.0
    %234 = vmatpush1.msra.mxu0 0.0
    %235 = vmatprep.subr.mxu0 0.0
    %236 = vmatpush1.msra.mxu0 0.0
    %237 = vmatprep.subr.mxu0 0.0
    %238 = vmatpush1.msra.mxu0 0.0
    %239 = vmatprep.subr.mxu0 0.0
    %240 = vmatpush1.msra.mxu0 0.0
    %241 = vmatprep.subr.mxu0 0.0
    %242 = vmatpush1.msra.mxu0 0.0
    %243 = vmatprep.subr.mxu0 0.0
    %244 = vmatpush1.msra.mxu0 0.0
    %245 = vmatprep.subr.mxu0 0.0
    %246 = vmatpush1.msra.mxu0 0.0
    %247 = vmatprep.subr.mxu0 0.0
    %248 = vmatpush1.msra.mxu0 0.0
    %249 = vmatprep.subr.mxu0 0.0
    %250 = vmatpush1.msra.mxu0 0.0
    %251 = vmatprep.subr.mxu0 0.0
    %252 = vmatpush1.msra.mxu0 0.0
    %253 = vmatprep.subr.mxu0 0.0
    %254 = vmatpush1.msra.mxu0 0.0
    %255 = vmatprep.subr.mxu0 0.0
    %256 = vmatpush1.msra.mxu0 0.0
    %257 = vmatprep.subr.mxu0 0.0
    %258 = vmatpush1.msra.mxu0 0.0
    %259 = vmatprep.subr.mxu0 0.0
    %260 = vmatpush1.msra.mxu0 0.0
    %261 = vmatprep.subr.mxu0 0.0
    %262 = vmatpush1.msra.mxu0 0.0
    %263 = vmatprep.subr.mxu0 0.0
    %264 = vmatpush1.msra.mxu0 0.0
    %265 = vmatprep.subr.mxu0 0.0
    %266 = vmatpush1.msra.mxu0 0.0
    %267 = vmatprep.subr.mxu0 0.0
    %268 = vmatpush1.msra.mxu0 0.0
    %269 = vmatprep.subr.mxu0 0.0
    %270 = vmatpush1.msra.mxu0 0.0
    %271 = vmatprep.subr.mxu0 0.0
    %272 = vmatpush1.msra.mxu0 0.0
    %273 = vmatprep.subr.mxu0 0.0
    %274 = vmatpush1.msra.mxu0 0.0
    %275 = vmatprep.subr.mxu0 0.0
    %276 = vmatpush1.msra.mxu0 0.0
    %277 = vmatprep.subr.mxu0 0.0
    %278 = vmatpush1.msra.mxu0 0.0
    %279 = vmatprep.mubr.f32.mxu0 0.0
    %280 = vmatmul.mubr.f32.gmra.mrb[0].mxu0 %v213
    %v281 = vpop.f32.mrb[0].mxu0
    %v282 = vadd.f32 %v211, %v281
    %v283 = vpop.f32.mrb[0].mxu0
    %284 = vdwg.mxu0
    %285 = vst [vmem:[%s6] sm:$0xff] %v282
    // Predicated region
    $region34: #{note_decoder_decode.1} parent=1 // pred_check
      _
    $region35: #{note_decoder_decode.1} parent=1 // pred_check_branch
      %287 = sbr.rel (0) target = $region37
    $region36: #{note_decoder_decode.1} parent=1 // pred_region
      _
    $region37: #{note_decoder_decode.1} parent=1 // pred_fallthru
      _
    // Predicated region
    $region38: #{note_decoder_decode.1} parent=1 // pred_check
      _
    $region39: #{note_decoder_decode.1} parent=1 // pred_check_branch
      %289 = sbr.rel (0) target = $region41
    $region40: #{note_decoder_decode.1} parent=1 // pred_region
      _
    $region41: #{note_decoder_decode.1} parent=1 // pred_fallthru
      _
    // Predicated region
    $region42: #{note_decoder_decode.1} parent=1 // pred_check
      _
    $region43: #{note_decoder_decode.1} parent=1 // pred_check_branch
      %291 = sbr.rel (0) target = $region45
    $region44: #{note_decoder_decode.1} parent=1 // pred_region
      _
    $region45: #{note_decoder_decode.1} parent=1 // pred_fallthru
      _
    // Predicated region
    $region46: #{note_decoder_decode.1} parent=1 // pred_check
      _
    $region47: #{note_decoder_decode.1} parent=1 // pred_check_branch
      %293 = sbr.rel (0) target = $region49
    $region48: #{note_decoder_decode.1} parent=1 // pred_region
      _
    $region49: #{note_decoder_decode.1} parent=1 // pred_fallthru
      _
    %294 = vsyncpa [#allocation8], 1
    %295 = vsyncpa [#allocation10], 1

</llo_original>
